<compile_context>
chip_gen: v7x
topology: tpu7x:2x2x1
jax: 0.10.0
libtpu: 0.0.40
codegen_flags: <defaults>
</compile_context>

<pallas_src>
import functools

import jax
import jax.numpy as jnp
from jax.experimental import pallas as pl
from jax.experimental.pallas import tpu as pltpu

EPS = 1e-5
LANE = 128  # lane width: every feature dim is padded to this


def _bn_scale_shift(sum_h, sum_h2, gamma, beta, inv_b):
    # Training-mode BatchNorm folded to a single scale/shift, from one-pass
    # sums: mean = S/B, var = Q/B - mean^2 (biased). Padded lanes have
    # gamma = 0 -> scale = 0, shift = 0, so padded columns stay exactly 0.
    mean = sum_h * inv_b
    var = sum_h2 * inv_b - mean * mean
    scale = gamma * jax.lax.rsqrt(var + EPS)
    shift = beta - mean * scale
    return scale, shift


def mlp_kernel(x_ref,
               w1_ref, g1_ref, be1_ref,
               w2_ref, g2_ref, be2_ref,
               w3_ref, b3_ref,
               o_ref,
               h1_buf, s1_ref, q1_ref,
               *, true_batch, tile_b, batch_pad):
    i = pl.program_id(0)

    @pl.when(i == 0)
    def _init():
        s1_ref[...] = jnp.zeros_like(s1_ref)
        q1_ref[...] = jnp.zeros_like(q1_ref)

    # ---- per-tile phase: layer-1 matmul + full-batch BN1 stat accumulation.
    # Bias b1 omitted: cancelled exactly by the BN mean subtraction.
    h1 = jnp.dot(x_ref[...], w1_ref[...], preferred_element_type=jnp.float32)
    off = pl.multiple_of(i * tile_b, tile_b)
    h1_buf[pl.ds(off, tile_b), :] = h1
    s1_ref[...] += jnp.sum(h1, axis=0, keepdims=True)
    q1_ref[...] += jnp.sum(h1 * h1, axis=0, keepdims=True)

    # ---- finalize: exact full-batch BN1 -> tanh -> L2 -> BN2 -> tanh -> L3.
    @pl.when(i == pl.num_programs(0) - 1)
    def _finalize():
        inv_b = jnp.float32(1.0 / true_batch)

        scale1, shift1 = _bn_scale_shift(s1_ref[...], q1_ref[...],
                                         g1_ref[...], be1_ref[...], inv_b)
        h = jnp.tanh(h1_buf[...] * scale1 + shift1)          # (B_pad, 128)

        if batch_pad > true_batch:
            # Padded rows are 0 pre-BN but become tanh(shift1) after BN;
            # zero them so layer-2 batch statistics stay exact.
            rows = jax.lax.broadcasted_iota(jnp.int32, h.shape, 0)
            h = jnp.where(rows < true_batch, h, 0.0)

        # Layer 2 (bias b2 cancelled by BN2) + full-batch BN2 + tanh.
        h2 = jnp.dot(h, w2_ref[...], preferred_element_type=jnp.float32)
        s2 = jnp.sum(h2, axis=0, keepdims=True)
        q2 = jnp.sum(h2 * h2, axis=0, keepdims=True)
        scale2, shift2 = _bn_scale_shift(s2, q2, g2_ref[...], be2_ref[...],
                                         inv_b)
        h2t = jnp.tanh(h2 * scale2 + shift2)

        # Layer 3, written lane-dense into the resident (B_pad, 128) block.
        o_ref[...] = jnp.dot(h2t, w3_ref[...],
                             preferred_element_type=jnp.float32) + b3_ref[...]


def _pad2(a, rows, cols):
    return jnp.pad(a, ((0, rows - a.shape[0]), (0, cols - a.shape[1])))


def prepare_params(params):
    """Pad parameters to lane-dense shapes ONCE (hoisted out of the forward)."""
    (w1, b1, g1, be1, w2, b2, g2, be2, w3, b3) = params
    del b1, b2  # exactly cancelled by training-mode BatchNorm mean subtraction
    return (_pad2(w1, LANE, LANE), _pad2(g1, 1, LANE), _pad2(be1, 1, LANE),
            _pad2(w2, LANE, LANE), _pad2(g2, 1, LANE), _pad2(be2, 1, LANE),
            _pad2(w3, LANE, LANE), _pad2(b3, 1, LANE))


@functools.partial(jax.jit, static_argnames=("n_outputs",))
def mlp_forward(x, padded_params, n_outputs=5):
    (w1p, g1p, be1p, w2p, g2p, be2p, w3p, b3p) = padded_params

    B = x.shape[0]
    TB = min(512, ((B + 7) // 8) * 8)      # batch tile (multiple of 8 sublanes)
    NT = pl.cdiv(B, TB)
    B_pad = NT * TB

    # x pad fuses into this jit-compiled executable (no extra dispatches).
    xp = _pad2(x.astype(jnp.float32), B_pad, LANE)

    kernel = functools.partial(mlp_kernel, true_batch=B, tile_b=TB,
                               batch_pad=B_pad)

    const = lambda i: (0, 0)  # VMEM-resident across all grid steps
    grid_spec = pltpu.PrefetchScalarGridSpec(
        num_scalar_prefetch=0,
        grid=(NT,),
        in_specs=[
            pl.BlockSpec((TB, LANE), lambda i: (i, 0)),   # x: streamed per tile
            pl.BlockSpec((LANE, LANE), const),            # w1 (resident)
            pl.BlockSpec((1, LANE), const),               # gamma1
            pl.BlockSpec((1, LANE), const),               # beta1
            pl.BlockSpec((LANE, LANE), const),            # w2 (resident)
            pl.BlockSpec((1, LANE), const),               # gamma2
            pl.BlockSpec((1, LANE), const),               # beta2
            pl.BlockSpec((LANE, LANE), const),            # w3 (resident)
            pl.BlockSpec((1, LANE), const),               # b3
        ],
        out_specs=pl.BlockSpec((B_pad, LANE), const),     # written once, at end
        scratch_shapes=[
            pltpu.VMEM((B_pad, LANE), jnp.float32),       # layer-1 pre-BN acts
            pltpu.VMEM((1, LANE), jnp.float32),           # sum(h1)
            pltpu.VMEM((1, LANE), jnp.float32),           # sum(h1^2)
        ],
    )

    out_padded = pl.pallas_call(
        kernel,
        out_shape=jax.ShapeDtypeStruct((B_pad, LANE), jnp.float32),
        grid_spec=grid_spec,
        # "arbitrary": cross-tile BN-stat accumulation makes the axis sequential.
        compiler_params=pltpu.CompilerParams(
            dimension_semantics=("arbitrary",)),
    )(xp, w1p, g1p, be1p, w2p, g2p, be2p, w3p, b3p)

    return out_padded[:B, :n_outputs]


def init_params(key, n_inputs=10, hidden=100, n_outputs=5):
    ks = jax.random.split(key, 6)
    # Linear weights stored as (in, out); biases / BN params as (1, F) rows.
    w1 = jax.random.normal(ks[0], (n_inputs, hidden), jnp.float32) * 0.1
    b1 = jax.random.normal(ks[1], (1, hidden), jnp.float32) * 0.01
    w2 = jax.random.normal(ks[2], (hidden, hidden), jnp.float32) * 0.1
    b2 = jax.random.normal(ks[3], (1, hidden), jnp.float32) * 0.01
    w3 = jax.random.normal(ks[4], (hidden, n_outputs), jnp.float32) * 0.1
    b3 = jax.random.normal(ks[5], (1, n_outputs), jnp.float32) * 0.01
    # BatchNorm1d affine params: PyTorch default init (weight=1, bias=0).
    g1 = jnp.ones((1, hidden), jnp.float32)
    be1 = jnp.zeros((1, hidden), jnp.float32)
    g2 = jnp.ones((1, hidden), jnp.float32)
    be2 = jnp.zeros((1, hidden), jnp.float32)
    return (w1, b1, g1, be1, w2, b2, g2, be2, w3, b3)


def reference_forward(x, params):
    # Pure-JAX reference (with the biases present, like the PyTorch module).
    (w1, b1, g1, be1, w2, b2, g2, be2, w3, b3) = params

    def bn(h, g, be):
        m = h.mean(0, keepdims=True)
        v = ((h - m) ** 2).mean(0, keepdims=True)
        return (h - m) / jnp.sqrt(v + EPS) * g + be

    h = jnp.tanh(bn(x @ w1 + b1, g1, be1))
    h = jnp.tanh(bn(h @ w2 + b2, g2, be2))
    return h @ w3 + b3


if __name__ == "__main__":
    key = jax.random.PRNGKey(0)
    k_x, k_p = jax.random.split(key)

    B, n_inputs = 8, 10
    x = jax.random.normal(k_x, (B, n_inputs), jnp.float32)
    params = init_params(k_p, n_inputs=n_inputs, hidden=100, n_outputs=5)

    padded_params = prepare_params(params)     # pad once, outside forward

    out = mlp_forward(x, padded_params)
    out = jax.block_until_ready(out)

    ref = reference_forward(x, params)
    assert out.shape == (B, 5), out.shape
    assert jnp.allclose(out, ref, atol=1e-4, rtol=1e-4), "mismatch vs reference"

    print("KERNEL_OK")
</pallas_src>

<mosaic_0001>
module attributes {stable_mosaic.version = 11 : i64} {
  func.func @mlp_kernel(%arg0: i32, %arg1: memref<8x128xf32, #tpu.memory_space<vmem>>, %arg2: memref<128x128xf32, #tpu.memory_space<vmem>>, %arg3: memref<1x128xf32, #tpu.memory_space<vmem>>, %arg4: memref<1x128xf32, #tpu.memory_space<vmem>>, %arg5: memref<128x128xf32, #tpu.memory_space<vmem>>, %arg6: memref<1x128xf32, #tpu.memory_space<vmem>>, %arg7: memref<1x128xf32, #tpu.memory_space<vmem>>, %arg8: memref<128x128xf32, #tpu.memory_space<vmem>>, %arg9: memref<1x128xf32, #tpu.memory_space<vmem>>, %arg10: memref<8x128xf32, #tpu.memory_space<vmem>>, %arg11: memref<8x128xf32, #tpu.memory_space<vmem>>, %arg12: memref<1x128xf32, #tpu.memory_space<vmem>>, %arg13: memref<1x128xf32, #tpu.memory_space<vmem>>) attributes {dimension_semantics = [#tpu.dimension_semantics<arbitrary>], iteration_bounds = array<i64: 1>, scalar_prefetch = 0 : i64, scratch_operands = 3 : i64, tpu.core_type = #tpu.core_type<tc>, window_params = [{transform_indices = @transform_0, window_bounds = array<i64: 8, 128>}, {pipeline_mode = #tpu.pipeline_mode<synchronous>, transform_indices = @transform_1, window_bounds = array<i64: 128, 128>}, {pipeline_mode = #tpu.pipeline_mode<synchronous>, transform_indices = @transform_2, window_bounds = array<i64: 1, 128>}, {pipeline_mode = #tpu.pipeline_mode<synchronous>, transform_indices = @transform_3, window_bounds = array<i64: 1, 128>}, {pipeline_mode = #tpu.pipeline_mode<synchronous>, transform_indices = @transform_4, window_bounds = array<i64: 128, 128>}, {pipeline_mode = #tpu.pipeline_mode<synchronous>, transform_indices = @transform_5, window_bounds = array<i64: 1, 128>}, {pipeline_mode = #tpu.pipeline_mode<synchronous>, transform_indices = @transform_6, window_bounds = array<i64: 1, 128>}, {pipeline_mode = #tpu.pipeline_mode<synchronous>, transform_indices = @transform_7, window_bounds = array<i64: 128, 128>}, {pipeline_mode = #tpu.pipeline_mode<synchronous>, transform_indices = @transform_8, window_bounds = array<i64: 1, 128>}, {pipeline_mode = #tpu.pipeline_mode<synchronous>, transform_indices = @transform_9, window_bounds = array<i64: 8, 128>}]} {
    %c0_i32 = arith.constant 0 : i32
    %0 = arith.cmpi eq, %arg0, %c0_i32 : i32
    %1 = arith.extui %0 : i1 to i32
    %c0_i32_0 = arith.constant 0 : i32
    %2 = arith.cmpi ne, %1, %c0_i32_0 : i32
    scf.if %2 {
      %cst_17 = arith.constant 0.000000e+00 : f32
      %24 = vector.broadcast %cst_17 : f32 to vector<1x128xf32>
      %c0_18 = arith.constant 0 : index
      %c0_19 = arith.constant 0 : index
      %25 = vector.load %arg12[%c0_18, %c0_19] : memref<1x128xf32, #tpu.memory_space<vmem>>, vector<1x128xf32>
      tpu.vector_store %arg12[%c0_18, %c0_19], %24 {strides = array<i32>} : memref<1x128xf32, #tpu.memory_space<vmem>>, vector<1x128xf32>,
      %cst_20 = arith.constant 0.000000e+00 : f32
      %26 = vector.broadcast %cst_20 : f32 to vector<1x128xf32>
      %c0_21 = arith.constant 0 : index
      %c0_22 = arith.constant 0 : index
      %27 = vector.load %arg13[%c0_21, %c0_22] : memref<1x128xf32, #tpu.memory_space<vmem>>, vector<1x128xf32>
      tpu.vector_store %arg13[%c0_21, %c0_22], %26 {strides = array<i32>} : memref<1x128xf32, #tpu.memory_space<vmem>>, vector<1x128xf32>,
    } else {
    }
    %c0 = arith.constant 0 : index
    %c0_1 = arith.constant 0 : index
    %3 = vector.load %arg1[%c0, %c0_1] : memref<8x128xf32, #tpu.memory_space<vmem>>, vector<8x128xf32>
    %c0_2 = arith.constant 0 : index
    %c0_3 = arith.constant 0 : index
    %4 = vector.load %arg2[%c0_2, %c0_3] : memref<128x128xf32, #tpu.memory_space<vmem>>, vector<128x128xf32>
    %cst = arith.constant dense<0.000000e+00> : vector<8x128xf32>
    %5 = tpu.matmul %3, %4, %cst {dimension_numbers = #tpu.dot_dimension_numbers<[1], [0], [0], [1], [0, 0, 1, 1], [], []>} : vector<8x128xf32>, vector<128x128xf32>, vector<8x128xf32> -> vector<8x128xf32>
    %c8_i32 = arith.constant 8 : i32
    %6 = arith.muli %arg0, %c8_i32 : i32
    %7 = tpu.assume_multiple %6, 8 : i32
    %8 = arith.index_cast %7 : i32 to index
    %c0_4 = arith.constant 0 : index
    %9 = vector.load %arg11[%8, %c0_4] : memref<8x128xf32, #tpu.memory_space<vmem>>, vector<8x128xf32>
    tpu.vector_store %arg11[%8, %c0_4], %5 {strides = array<i32>} : memref<8x128xf32, #tpu.memory_space<vmem>>, vector<8x128xf32>,
    %c0_5 = arith.constant 0 : index
    %c0_6 = arith.constant 0 : index
    %10 = vector.load %arg12[%c0_5, %c0_6] : memref<1x128xf32, #tpu.memory_space<vmem>>, vector<1x128xf32>
    %cst_7 = arith.constant dense<0.000000e+00> : vector<128xf32>
    %11 = vector.multi_reduction <add>, %5, %cst_7 [0] : vector<8x128xf32> to vector<128xf32>
    %12 = vector.shape_cast %11 : vector<128xf32> to vector<1x128xf32>
    %13 = arith.addf %10, %12 : vector<1x128xf32>
    %c0_8 = arith.constant 0 : index
    %c0_9 = arith.constant 0 : index
    %14 = vector.load %arg12[%c0_8, %c0_9] : memref<1x128xf32, #tpu.memory_space<vmem>>, vector<1x128xf32>
    tpu.vector_store %arg12[%c0_8, %c0_9], %13 {strides = array<i32>} : memref<1x128xf32, #tpu.memory_space<vmem>>, vector<1x128xf32>,
    %c0_10 = arith.constant 0 : index
    %c0_11 = arith.constant 0 : index
    %15 = vector.load %arg13[%c0_10, %c0_11] : memref<1x128xf32, #tpu.memory_space<vmem>>, vector<1x128xf32>
    %16 = arith.mulf %5, %5 : vector<8x128xf32>
    %cst_12 = arith.constant dense<0.000000e+00> : vector<128xf32>
    %17 = vector.multi_reduction <add>, %16, %cst_12 [0] : vector<8x128xf32> to vector<128xf32>
    %18 = vector.shape_cast %17 : vector<128xf32> to vector<1x128xf32>
    %19 = arith.addf %15, %18 : vector<1x128xf32>
    %c0_13 = arith.constant 0 : index
    %c0_14 = arith.constant 0 : index
    %20 = vector.load %arg13[%c0_13, %c0_14] : memref<1x128xf32, #tpu.memory_space<vmem>>, vector<1x128xf32>
    tpu.vector_store %arg13[%c0_13, %c0_14], %19 {strides = array<i32>} : memref<1x128xf32, #tpu.memory_space<vmem>>, vector<1x128xf32>,
    %c0_i32_15 = arith.constant 0 : i32
    %21 = arith.cmpi eq, %arg0, %c0_i32_15 : i32
    %22 = arith.extui %21 : i1 to i32
    %c0_i32_16 = arith.constant 0 : i32
    %23 = arith.cmpi ne, %22, %c0_i32_16 : i32
    scf.if %23 {
      %c0_17 = arith.constant 0 : index
      %c0_18 = arith.constant 0 : index
      %24 = vector.load %arg12[%c0_17, %c0_18] : memref<1x128xf32, #tpu.memory_space<vmem>>, vector<1x128xf32>
      %c0_19 = arith.constant 0 : index
      %c0_20 = arith.constant 0 : index
      %25 = vector.load %arg13[%c0_19, %c0_20] : memref<1x128xf32, #tpu.memory_space<vmem>>, vector<1x128xf32>
      %c0_21 = arith.constant 0 : index
      %c0_22 = arith.constant 0 : index
      %26 = vector.load %arg3[%c0_21, %c0_22] : memref<1x128xf32, #tpu.memory_space<vmem>>, vector<1x128xf32>
      %c0_23 = arith.constant 0 : index
      %c0_24 = arith.constant 0 : index
      %27 = vector.load %arg4[%c0_23, %c0_24] : memref<1x128xf32, #tpu.memory_space<vmem>>, vector<1x128xf32>
      %cst_25 = arith.constant 1.250000e-01 : f32
      %28 = vector.broadcast %cst_25 : f32 to vector<1x128xf32>
      %29 = arith.mulf %24, %28 : vector<1x128xf32>
      %cst_26 = arith.constant 1.250000e-01 : f32
      %30 = vector.broadcast %cst_26 : f32 to vector<1x128xf32>
      %31 = arith.mulf %25, %30 : vector<1x128xf32>
      %32 = arith.mulf %29, %29 : vector<1x128xf32>
      %33 = arith.subf %31, %32 : vector<1x128xf32>
      %cst_27 = arith.constant 9.99999974E-6 : f32
      %34 = vector.broadcast %cst_27 : f32 to vector<1x128xf32>
      %35 = arith.addf %33, %34 : vector<1x128xf32>
      %36 = math.rsqrt %35 : vector<1x128xf32>
      %37 = arith.mulf %26, %36 : vector<1x128xf32>
      %38 = arith.mulf %29, %37 : vector<1x128xf32>
      %39 = arith.subf %27, %38 : vector<1x128xf32>
      %c0_28 = arith.constant 0 : index
      %c0_29 = arith.constant 0 : index
      %40 = vector.load %arg11[%c0_28, %c0_29] : memref<8x128xf32, #tpu.memory_space<vmem>>, vector<8x128xf32>
      %41 = vector.broadcast %37 : vector<1x128xf32> to vector<8x128xf32>
      %42 = arith.mulf %40, %41 : vector<8x128xf32>
      %43 = vector.broadcast %39 : vector<1x128xf32> to vector<8x128xf32>
      %44 = arith.addf %42, %43 : vector<8x128xf32>
      %45 = math.tanh %44 : vector<8x128xf32>
      %c0_30 = arith.constant 0 : index
      %c0_31 = arith.constant 0 : index
      %46 = vector.load %arg5[%c0_30, %c0_31] : memref<128x128xf32, #tpu.memory_space<vmem>>, vector<128x128xf32>
      %cst_32 = arith.constant dense<0.000000e+00> : vector<8x128xf32>
      %47 = tpu.matmul %45, %46, %cst_32 {dimension_numbers = #tpu.dot_dimension_numbers<[1], [0], [0], [1], [0, 0, 1, 1], [], []>} : vector<8x128xf32>, vector<128x128xf32>, vector<8x128xf32> -> vector<8x128xf32>
      %cst_33 = arith.constant dense<0.000000e+00> : vector<128xf32>
      %48 = vector.multi_reduction <add>, %47, %cst_33 [0] : vector<8x128xf32> to vector<128xf32>
      %49 = vector.shape_cast %48 : vector<128xf32> to vector<1x128xf32>
      %50 = arith.mulf %47, %47 : vector<8x128xf32>
      %cst_34 = arith.constant dense<0.000000e+00> : vector<128xf32>
      %51 = vector.multi_reduction <add>, %50, %cst_34 [0] : vector<8x128xf32> to vector<128xf32>
      %52 = vector.shape_cast %51 : vector<128xf32> to vector<1x128xf32>
      %c0_35 = arith.constant 0 : index
      %c0_36 = arith.constant 0 : index
      %53 = vector.load %arg6[%c0_35, %c0_36] : memref<1x128xf32, #tpu.memory_space<vmem>>, vector<1x128xf32>
      %c0_37 = arith.constant 0 : index
      %c0_38 = arith.constant 0 : index
      %54 = vector.load %arg7[%c0_37, %c0_38] : memref<1x128xf32, #tpu.memory_space<vmem>>, vector<1x128xf32>
      %cst_39 = arith.constant 1.250000e-01 : f32
      %55 = vector.broadcast %cst_39 : f32 to vector<1x128xf32>
      %56 = arith.mulf %49, %55 : vector<1x128xf32>
      %cst_40 = arith.constant 1.250000e-01 : f32
      %57 = vector.broadcast %cst_40 : f32 to vector<1x128xf32>
      %58 = arith.mulf %52, %57 : vector<1x128xf32>
      %59 = arith.mulf %56, %56 : vector<1x128xf32>
      %60 = arith.subf %58, %59 : vector<1x128xf32>
      %cst_41 = arith.constant 9.99999974E-6 : f32
      %61 = vector.broadcast %cst_41 : f32 to vector<1x128xf32>
      %62 = arith.addf %60, %61 : vector<1x128xf32>
      %63 = math.rsqrt %62 : vector<1x128xf32>
      %64 = arith.mulf %53, %63 : vector<1x128xf32>
      %65 = arith.mulf %56, %64 : vector<1x128xf32>
      %66 = arith.subf %54, %65 : vector<1x128xf32>
      %67 = vector.broadcast %64 : vector<1x128xf32> to vector<8x128xf32>
      %68 = arith.mulf %47, %67 : vector<8x128xf32>
      %69 = vector.broadcast %66 : vector<1x128xf32> to vector<8x128xf32>
      %70 = arith.addf %68, %69 : vector<8x128xf32>
      %71 = math.tanh %70 : vector<8x128xf32>
      %c0_42 = arith.constant 0 : index
      %c0_43 = arith.constant 0 : index
      %72 = vector.load %arg8[%c0_42, %c0_43] : memref<128x128xf32, #tpu.memory_space<vmem>>, vector<128x128xf32>
      %cst_44 = arith.constant dense<0.000000e+00> : vector<8x128xf32>
      %73 = tpu.matmul %71, %72, %cst_44 {dimension_numbers = #tpu.dot_dimension_numbers<[1], [0], [0], [1], [0, 0, 1, 1], [], []>} : vector<8x128xf32>, vector<128x128xf32>, vector<8x128xf32> -> vector<8x128xf32>
      %c0_45 = arith.constant 0 : index
      %c0_46 = arith.constant 0 : index
      %74 = vector.load %arg9[%c0_45, %c0_46] : memref<1x128xf32, #tpu.memory_space<vmem>>, vector<1x128xf32>
      %75 = vector.broadcast %74 : vector<1x128xf32> to vector<8x128xf32>
      %76 = arith.addf %73, %75 : vector<8x128xf32>
      %c0_47 = arith.constant 0 : index
      %c0_48 = arith.constant 0 : index
      %77 = vector.load %arg10[%c0_47, %c0_48] : memref<8x128xf32, #tpu.memory_space<vmem>>, vector<8x128xf32>
      tpu.vector_store %arg10[%c0_47, %c0_48], %76 {strides = array<i32>} : memref<8x128xf32, #tpu.memory_space<vmem>>, vector<8x128xf32>,
    } else {
    }
    return
  }
  func.func @transform_0(%arg0: i32) -> (i32, i32) {
    %c0_i32 = arith.constant 0 : i32
    %c0_i32_0 = arith.constant 0 : i32
    return %arg0, %c0_i32 : i32, i32
  }
  func.func @transform_1(%arg0: i32) -> (i32, i32) {
    %c0_i32 = arith.constant 0 : i32
    %c0_i32_0 = arith.constant 0 : i32
    %c0_i32_1 = arith.constant 0 : i32
    return %c0_i32, %c0_i32_0 : i32, i32
  }
  func.func @transform_2(%arg0: i32) -> (i32, i32) {
    %c0_i32 = arith.constant 0 : i32
    %c0_i32_0 = arith.constant 0 : i32
    %c0_i32_1 = arith.constant 0 : i32
    return %c0_i32, %c0_i32_0 : i32, i32
  }
  func.func @transform_3(%arg0: i32) -> (i32, i32) {
    %c0_i32 = arith.constant 0 : i32
    %c0_i32_0 = arith.constant 0 : i32
    %c0_i32_1 = arith.constant 0 : i32
    return %c0_i32, %c0_i32_0 : i32, i32
  }
  func.func @transform_4(%arg0: i32) -> (i32, i32) {
    %c0_i32 = arith.constant 0 : i32
    %c0_i32_0 = arith.constant 0 : i32
    %c0_i32_1 = arith.constant 0 : i32
    return %c0_i32, %c0_i32_0 : i32, i32
  }
  func.func @transform_5(%arg0: i32) -> (i32, i32) {
    %c0_i32 = arith.constant 0 : i32
    %c0_i32_0 = arith.constant 0 : i32
    %c0_i32_1 = arith.constant 0 : i32
    return %c0_i32, %c0_i32_0 : i32, i32
  }
  func.func @transform_6(%arg0: i32) -> (i32, i32) {
    %c0_i32 = arith.constant 0 : i32
    %c0_i32_0 = arith.constant 0 : i32
    %c0_i32_1 = arith.constant 0 : i32
    return %c0_i32, %c0_i32_0 : i32, i32
  }
  func.func @transform_7(%arg0: i32) -> (i32, i32) {
    %c0_i32 = arith.constant 0 : i32
    %c0_i32_0 = arith.constant 0 : i32
    %c0_i32_1 = arith.constant 0 : i32
    return %c0_i32, %c0_i32_0 : i32, i32
  }
  func.func @transform_8(%arg0: i32) -> (i32, i32) {
    %c0_i32 = arith.constant 0 : i32
    %c0_i32_0 = arith.constant 0 : i32
    %c0_i32_1 = arith.constant 0 : i32
    return %c0_i32, %c0_i32_0 : i32, i32
  }
  func.func @transform_9(%arg0: i32) -> (i32, i32) {
    %c0_i32 = arith.constant 0 : i32
    %c0_i32_0 = arith.constant 0 : i32
    %c0_i32_1 = arith.constant 0 : i32
    return %c0_i32, %c0_i32_0 : i32, i32
  }
}

</mosaic_0001>

<llo_original>
// kernel: mlp_forward.1
$region0: #{mlp_forward.1}
  #allocation0 [shape = 'u32[]', space=smem, size = 0x4, offset = 0x4, fixed_abs, tag = 'smem constant byte address 0x4 - core index']
  #allocation1 [shape = 'u32[144,128]{1,0:T(1,128)}', space=vmem, size = 0x12000, scoped, tag = 'internal scratch']
  #allocation2 [shape = 'f32[8,128]{1,0:T(8,128)}', space=vmem, size = 0x1000, scoped, tag = 'scratch operand']
  #allocation3 [shape = 'f32[1,128]{1,0:T(1,128)}', space=vmem, size = 0x200, scoped, tag = 'scratch operand']
  #allocation4 [shape = 'f32[1,128]{1,0:T(1,128)}', space=vmem, size = 0x200, scoped, tag = 'scratch operand']
  %s0 = inlined_call_operand.vmem [shape: f32[8,128], index: 0, kind: input, shape index: {}]
  %s1 = inlined_call_operand.hbm [shape: f32[128,128], index: 1, kind: input, shape index: {}]
  %s2 = inlined_call_operand.vmem [shape: f32[1,128], index: 2, kind: input, shape index: {}]
  %s3 = inlined_call_operand.vmem [shape: f32[1,128], index: 3, kind: input, shape index: {}]
  %s4 = inlined_call_operand.hbm [shape: f32[128,128], index: 4, kind: input, shape index: {}]
  %s5 = inlined_call_operand.vmem [shape: f32[1,128], index: 5, kind: input, shape index: {}]
  %s6 = inlined_call_operand.vmem [shape: f32[1,128], index: 6, kind: input, shape index: {}]
  %s7 = inlined_call_operand.hbm [shape: f32[128,128], index: 7, kind: input, shape index: {}]
  %s8 = inlined_call_operand.vmem [shape: f32[1,128], index: 8, kind: input, shape index: {}]
  %s9 = inlined_call_operand.hbm [shape: f32[8,128], index: 9, kind: output, shape index: {}]
  %s10 = sld [smem:[#allocation0]]
  $region66: #{mlp_forward.1} parent=0
    _
  %s12 = ssub.s32 1, %s10
  %s13 = scalar_select 0, %s12, %s10
  $region1: #{mlp_forward.1} parent=0
    #allocation5 [shape = 'u8[65536]{0}', space=vmem, size = 0x10000, scoped, tag = 'input window, operand 1, single buffered']
    #allocation6 [shape = 's32[1]{0}', space=sflag, size = 0x4, scoped, tag = 'scoped memory for mlp_forward.1']
    #allocation7 [shape = 's32[1]{0}', space=sflag, size = 0x4, scoped, tag = 'scoped memory for mlp_forward.1']
    #allocation8 [shape = 'u8[65536]{0}', space=vmem, size = 0x10000, scoped, tag = 'input window, operand 4, single buffered']
    #allocation9 [shape = 's32[1]{0}', space=sflag, size = 0x4, scoped, tag = 'scoped memory for mlp_forward.1']
    #allocation10 [shape = 'u8[65536]{0}', space=vmem, size = 0x10000, scoped, tag = 'input window, operand 7, single buffered']
    #allocation11 [shape = 'u8[4096]{0}', space=vmem, size = 0x1000, scoped, tag = 'output window, operand 0, single buffered']
    %14 = vsyncpa [#allocation6], 0
    %15 = vsyncpa [#allocation9], 0
    %16 = vsyncpa [#allocation7], 0
    // Predicated region
    $region2: #{mlp_forward.1} parent=1 // pred_check
      _
    $region3: #{mlp_forward.1} parent=1 // pred_check_branch
      %18 = sbr.rel (0) target = $region5
    $region4: #{mlp_forward.1} parent=1 // pred_region
      _
    $region5: #{mlp_forward.1} parent=1 // pred_fallthru
      _
    // Predicated region
    $region6: #{mlp_forward.1} parent=1 // pred_check
      _
    $region7: #{mlp_forward.1} parent=1 // pred_check_branch
      %20 = sbr.rel (0) target = $region9
    $region8: #{mlp_forward.1} parent=1 // pred_region
      %s22 = ssub.s32 2048, 2048
      %23 = vsyncadd [#allocation6], %s22
      %s24 = sshll.u32 [#allocation5], 4
      %s25 = int_to_ptr.vmem [resolvable:$true] %s24
      %30 = dma.hbm_to_vmem [thread:$0]  %s1, 2048, %s25, [#allocation6], 128, 128, 8
    $region9: #{mlp_forward.1} parent=1 // pred_fallthru
      _
    // Predicated region
    $region10: #{mlp_forward.1} parent=1 // pred_check
      _
    $region11: #{mlp_forward.1} parent=1 // pred_check_branch
      %32 = sbr.rel (0) target = $region13
    $region12: #{mlp_forward.1} parent=1 // pred_region
      _
    $region13: #{mlp_forward.1} parent=1 // pred_fallthru
      _
    // Predicated region
    $region14: #{mlp_forward.1} parent=1 // pred_check
      _
    $region15: #{mlp_forward.1} parent=1 // pred_check_branch
      %34 = sbr.rel (0) target = $region17
    $region16: #{mlp_forward.1} parent=1 // pred_region
      _
    $region17: #{mlp_forward.1} parent=1 // pred_fallthru
      _
    // Predicated region
    $region18: #{mlp_forward.1} parent=1 // pred_check
      _
    $region19: #{mlp_forward.1} parent=1 // pred_check_branch
      %36 = sbr.rel (0) target = $region21
    $region20: #{mlp_forward.1} parent=1 // pred_region
      %s38 = ssub.s32 2048, 2048
      %39 = vsyncadd [#allocation9], %s38
      %s40 = sshll.u32 [#allocation8], 4
      %s41 = int_to_ptr.vmem [resolvable:$true] %s40
      %46 = dma.hbm_to_vmem [thread:$0]  %s4, 2048, %s41, [#allocation9], 128, 128, 8
    $region21: #{mlp_forward.1} parent=1 // pred_fallthru
      _
    // Predicated region
    $region22: #{mlp_forward.1} parent=1 // pred_check
      _
    $region23: #{mlp_forward.1} parent=1 // pred_check_branch
      %48 = sbr.rel (0) target = $region25
    $region24: #{mlp_forward.1} parent=1 // pred_region
      _
    $region25: #{mlp_forward.1} parent=1 // pred_fallthru
      _
    // Predicated region
    $region26: #{mlp_forward.1} parent=1 // pred_check
      _
    $region27: #{mlp_forward.1} parent=1 // pred_check_branch
      %50 = sbr.rel (0) target = $region29
    $region28: #{mlp_forward.1} parent=1 // pred_region
      _
    $region29: #{mlp_forward.1} parent=1 // pred_fallthru
      _
    // Predicated region
    $region30: #{mlp_forward.1} parent=1 // pred_check
      _
    $region31: #{mlp_forward.1} parent=1 // pred_check_branch
      %52 = sbr.rel (0) target = $region33
    $region32: #{mlp_forward.1} parent=1 // pred_region
      %s54 = ssub.s32 2048, 2048
      %55 = vsyncadd [#allocation9], %s54
      %s56 = sshll.u32 [#allocation10], 4
      %s57 = int_to_ptr.vmem [resolvable:$true] %s56
      %62 = dma.hbm_to_vmem [thread:$0]  %s7, 2048, %s57, [#allocation9], 128, 128, 8
    $region33: #{mlp_forward.1} parent=1 // pred_fallthru
      _
    // Predicated region
    $region34: #{mlp_forward.1} parent=1 // pred_check
      _
    $region35: #{mlp_forward.1} parent=1 // pred_check_branch
      %64 = sbr.rel (0) target = $region37
    $region36: #{mlp_forward.1} parent=1 // pred_region
      _
    $region37: #{mlp_forward.1} parent=1 // pred_fallthru
      _
    // Predicated region
    $region38: #{mlp_forward.1} parent=1 // pred_check
      _
    $region39: #{mlp_forward.1} parent=1 // pred_check_branch
      %66 = sbr.rel (0) target = $region41
    $region40: #{mlp_forward.1} parent=1 // pred_region
      %67 = dma.done [#allocation6], 2048
    $region41: #{mlp_forward.1} parent=1 // pred_fallthru
      _
    // Predicated region
    $region42: #{mlp_forward.1} parent=1 // pred_check
      _
    $region43: #{mlp_forward.1} parent=1 // pred_check_branch
      %69 = sbr.rel (0) target = $region45
    $region44: #{mlp_forward.1} parent=1 // pred_region
      %70 = dma.done [#allocation9], 2048
    $region45: #{mlp_forward.1} parent=1 // pred_fallthru
      _
    // Predicated region
    $region46: #{mlp_forward.1} parent=1 // pred_check
      _
    $region47: #{mlp_forward.1} parent=1 // pred_check_branch
      %72 = sbr.rel (0) target = $region49
    $region48: #{mlp_forward.1} parent=1 // pred_region
      %73 = dma.done [#allocation9], 2048
    $region49: #{mlp_forward.1} parent=1 // pred_fallthru
      _
    %p74 = scmp.eq.s32.totalorder 0, 0
    // Predicated region
    $region50: #{mlp_forward.1} parent=1 // pred_check
      %p75 = pneg %p74
    $region51: #{mlp_forward.1} parent=1 // pred_check_branch
      %77 = sbr.rel (%p75) target = $region53
    $region52: #{mlp_forward.1} parent=1 // pred_region
      %78 = vst [vmem:[#allocation3] sm:$0x1] 0.0
      %79 = vst [vmem:[#allocation4] sm:$0x1] 0.0
    $region53: #{mlp_forward.1} parent=1 // pred_fallthru
      _
    %v80 = vld [vmem:[%s0] sm:$0xff]
    %v81 = vld [vmem:[#allocation5] sm:$0xff]
    %v82 = vld [vmem:[#allocation5 + $0x8] sm:$0xff]
    %v83 = vld [vmem:[#allocation5 + $0x10] sm:$0xff]
    %v84 = vld [vmem:[#allocation5 + $0x18] sm:$0xff]
    %v85 = vld [vmem:[#allocation5 + $0x20] sm:$0xff]
    %v86 = vld [vmem:[#allocation5 + $0x28] sm:$0xff]
    %v87 = vld [vmem:[#allocation5 + $0x30] sm:$0xff]
    %v88 = vld [vmem:[#allocation5 + $0x38] sm:$0xff]
    %v89 = vld [vmem:[#allocation5 + $0x40] sm:$0xff]
    %v90 = vld [vmem:[#allocation5 + $0x48] sm:$0xff]
    %v91 = vld [vmem:[#allocation5 + $0x50] sm:$0xff]
    %v92 = vld [vmem:[#allocation5 + $0x58] sm:$0xff]
    %v93 = vld [vmem:[#allocation5 + $0x60] sm:$0xff]
    %v94 = vld [vmem:[#allocation5 + $0x68] sm:$0xff]
    %v95 = vld [vmem:[#allocation5 + $0x70] sm:$0xff]
    %v96 = vld [vmem:[#allocation5 + $0x78] sm:$0xff]
    %97 = vmatprep.subr.mxu0 0.0
    %98 = vmatpush1.msra.mxu0 %v81
    %99 = vmatprep.subr.mxu0 0.0
    %100 = vmatpush1.msra.mxu0 %v82
    %101 = vmatprep.subr.mxu0 0.0
    %102 = vmatpush1.msra.mxu0 %v83
    %103 = vmatprep.subr.mxu0 0.0
    %104 = vmatpush1.msra.mxu0 %v84
    %105 = vmatprep.subr.mxu0 0.0
    %106 = vmatpush1.msra.mxu0 %v85
    %107 = vmatprep.subr.mxu0 0.0
    %108 = vmatpush1.msra.mxu0 %v86
    %109 = vmatprep.subr.mxu0 0.0
    %110 = vmatpush1.msra.mxu0 %v87
    %111 = vmatprep.subr.mxu0 0.0
    %112 = vmatpush1.msra.mxu0 %v88
    %113 = vmatprep.subr.mxu0 0.0
    %114 = vmatpush1.msra.mxu0 %v89
    %115 = vmatprep.subr.mxu0 0.0
    %116 = vmatpush1.msra.mxu0 %v90
    %117 = vmatprep.subr.mxu0 0.0
    %118 = vmatpush1.msra.mxu0 %v91
    %119 = vmatprep.subr.mxu0 0.0
    %120 = vmatpush1.msra.mxu0 %v92
    %121 = vmatprep.subr.mxu0 0.0
    %122 = vmatpush1.msra.mxu0 %v93
    %123 = vmatprep.subr.mxu0 0.0
    %124 = vmatpush1.msra.mxu0 %v94
    %125 = vmatprep.subr.mxu0 0.0
    %126 = vmatpush1.msra.mxu0 %v95
    %127 = vmatprep.subr.mxu0 0.0
    %128 = vmatpush1.msra.mxu0 %v96
    %129 = vmatprep.subr.mxu0 0.0
    %130 = vmatpush1.msra.mxu0 0.0
    %131 = vmatprep.subr.mxu0 0.0
    %132 = vmatpush1.msra.mxu0 0.0
    %133 = vmatprep.subr.mxu0 0.0
    %134 = vmatpush1.msra.mxu0 0.0
    %135 = vmatprep.subr.mxu0 0.0
    %136 = vmatpush1.msra.mxu0 0.0
    %137 = vmatprep.subr.mxu0 0.0
    %138 = vmatpush1.msra.mxu0 0.0
    %139 = vmatprep.subr.mxu0 0.0
    %140 = vmatpush1.msra.mxu0 0.0
    %141 = vmatprep.subr.mxu0 0.0
    %142 = vmatpush1.msra.mxu0 0.0
    %143 = vmatprep.subr.mxu0 0.0
    %144 = vmatpush1.msra.mxu0 0.0
    %145 = vmatprep.subr.mxu0 0.0
    %146 = vmatpush1.msra.mxu0 0.0
    %147 = vmatprep.subr.mxu0 0.0
    %148 = vmatpush1.msra.mxu0 0.0
    %149 = vmatprep.subr.mxu0 0.0
    %150 = vmatpush1.msra.mxu0 0.0
    %151 = vmatprep.subr.mxu0 0.0
    %152 = vmatpush1.msra.mxu0 0.0
    %153 = vmatprep.subr.mxu0 0.0
    %154 = vmatpush1.msra.mxu0 0.0
    %155 = vmatprep.subr.mxu0 0.0
    %156 = vmatpush1.msra.mxu0 0.0
    %157 = vmatprep.subr.mxu0 0.0
    %158 = vmatpush1.msra.mxu0 0.0
    %159 = vmatprep.subr.mxu0 0.0
    %160 = vmatpush1.msra.mxu0 0.0
    %161 = vmatprep.mubr.f32.mxu0 0.0
    %162 = vmatmul.mubr.f32.gmra.mrb[0].mxu0 %v80
    %v163 = vpop.f32.mrb[0].mxu0
    %v164 = vadd.f32 0.0, %v163
    %v165 = vpop.f32.mrb[0].mxu0
    %166 = vdwg.mxu0
    %s167 = smul.u32 0, 8
    %s168 = scalar_lea.vmem [#allocation2], %s167
    %169 = vst [vmem:[%s168] sm:$0xff] %v164
    %v170 = vld [vmem:[#allocation3] sm:$0x1]
    %v171 = vrot.slane %v164, 4
    %v172 = vadd.f32 %v164, %v171
    %v173 = vrot.slane %v172, 2
    %v174 = vadd.f32 %v172, %v173
    %v175 = vrot.slane %v174, 1
    %v176 = vadd.f32 %v174, %v175
    %v177 = vadd.f32 %v170, %v176
    %178 = vst [vmem:[#allocation3] sm:$0x1] %v177
    %v179 = vld [vmem:[#allocation4] sm:$0x1]
    %v180 = vmul.f32 %v164, %v164
    %v181 = vrot.slane %v180, 4
    %v182 = vadd.f32 %v180, %v181
    %v183 = vrot.slane %v182, 2
    %v184 = vadd.f32 %v182, %v183
    %v185 = vrot.slane %v184, 1
    %v186 = vadd.f32 %v184, %v185
    %v187 = vadd.f32 %v179, %v186
    %188 = vst [vmem:[#allocation4] sm:$0x1] %v187
    // Predicated region
    $region54: #{mlp_forward.1} parent=1 // pred_check
      %p189 = pneg %p74
    $region55: #{mlp_forward.1} parent=1 // pred_check_branch
      %191 = sbr.rel (%p189) target = $region57
    $region56: #{mlp_forward.1} parent=1 // pred_region
      %v192 = vld [vmem:[#allocation3] sm:$0x1]
      %v193 = vld [vmem:[#allocation4] sm:$0x1]
      %v194 = vld [vmem:[%s2] sm:$0x1]
      %v195 = vld [vmem:[%s3] sm:$0x1]
      %v196 = vmul.f32 %v192, 0.125
      %v197 = vmul.f32 %v193, 0.125
      %v198 = vmul.f32 %v196, %v196
      %v199 = vsub.f32 %v197, %v198
      %v200 = vadd.f32 %v199, 1e-05
      %v201 = vrsqrt.pop %v200
      %v202 = vmul.f32 %v194, %v201
      %v203 = vmul.f32 %v196, %v202
      %v204 = vsub.f32 %v195, %v203
      %v205 = vld [vmem:[#allocation2] sm:$0xff]
      %v207 = vlaneseq
      %v208 = vshrl.u32 %v207, 7
      %v209 = vsub.s32 0, %v208
      %v210 = vrot.slane %v202, %v209
      %v212 = vmul.f32 %v205, %v210
      %v214 = vlaneseq
      %v215 = vshrl.u32 %v214, 7
      %v216 = vsub.s32 0, %v215
      %v217 = vrot.slane %v204, %v216
      %v219 = vadd.f32 %v212, %v217
      %v220 = vtanh.pop %v219
      %v221 = vld [vmem:[#allocation8] sm:$0xff]
      %v222 = vld [vmem:[#allocation8 + $0x8] sm:$0xff]
      %v223 = vld [vmem:[#allocation8 + $0x10] sm:$0xff]
      %v224 = vld [vmem:[#allocation8 + $0x18] sm:$0xff]
      %v225 = vld [vmem:[#allocation8 + $0x20] sm:$0xff]
      %v226 = vld [vmem:[#allocation8 + $0x28] sm:$0xff]
      %v227 = vld [vmem:[#allocation8 + $0x30] sm:$0xff]
      %v228 = vld [vmem:[#allocation8 + $0x38] sm:$0xff]
      %v229 = vld [vmem:[#allocation8 + $0x40] sm:$0xff]
      %v230 = vld [vmem:[#allocation8 + $0x48] sm:$0xff]
      %v231 = vld [vmem:[#allocation8 + $0x50] sm:$0xff]
      %v232 = vld [vmem:[#allocation8 + $0x58] sm:$0xff]
      %v233 = vld [vmem:[#allocation8 + $0x60] sm:$0xff]
      %v234 = vld [vmem:[#allocation8 + $0x68] sm:$0xff]
      %v235 = vld [vmem:[#allocation8 + $0x70] sm:$0xff]
      %v236 = vld [vmem:[#allocation8 + $0x78] sm:$0xff]
      %237 = vmatprep.subr.mxu0 0.0
      %238 = vmatpush1.msra.mxu0 %v221
      %239 = vmatprep.subr.mxu0 0.0
      %240 = vmatpush1.msra.mxu0 %v222
      %241 = vmatprep.subr.mxu0 0.0
      %242 = vmatpush1.msra.mxu0 %v223
      %243 = vmatprep.subr.mxu0 0.0
      %244 = vmatpush1.msra.mxu0 %v224
      %245 = vmatprep.subr.mxu0 0.0
      %246 = vmatpush1.msra.mxu0 %v225
      %247 = vmatprep.subr.mxu0 0.0
      %248 = vmatpush1.msra.mxu0 %v226
      %249 = vmatprep.subr.mxu0 0.0
      %250 = vmatpush1.msra.mxu0 %v227
      %251 = vmatprep.subr.mxu0 0.0
      %252 = vmatpush1.msra.mxu0 %v228
      %253 = vmatprep.subr.mxu0 0.0
      %254 = vmatpush1.msra.mxu0 %v229
      %255 = vmatprep.subr.mxu0 0.0
      %256 = vmatpush1.msra.mxu0 %v230
      %257 = vmatprep.subr.mxu0 0.0
      %258 = vmatpush1.msra.mxu0 %v231
      %259 = vmatprep.subr.mxu0 0.0
      %260 = vmatpush1.msra.mxu0 %v232
      %261 = vmatprep.subr.mxu0 0.0
      %262 = vmatpush1.msra.mxu0 %v233
      %263 = vmatprep.subr.mxu0 0.0
      %264 = vmatpush1.msra.mxu0 %v234
      %265 = vmatprep.subr.mxu0 0.0
      %266 = vmatpush1.msra.mxu0 %v235
      %267 = vmatprep.subr.mxu0 0.0
      %268 = vmatpush1.msra.mxu0 %v236
      %269 = vmatprep.subr.mxu0 0.0
      %270 = vmatpush1.msra.mxu0 0.0
      %271 = vmatprep.subr.mxu0 0.0
      %272 = vmatpush1.msra.mxu0 0.0
      %273 = vmatprep.subr.mxu0 0.0
      %274 = vmatpush1.msra.mxu0 0.0
      %275 = vmatprep.subr.mxu0 0.0
      %276 = vmatpush1.msra.mxu0 0.0
      %277 = vmatprep.subr.mxu0 0.0
      %278 = vmatpush1.msra.mxu0 0.0
      %279 = vmatprep.subr.mxu0 0.0
      %280 = vmatpush1.msra.mxu0 0.0
      %281 = vmatprep.subr.mxu0 0.0
      %282 = vmatpush1.msra.mxu0 0.0
      %283 = vmatprep.subr.mxu0 0.0
      %284 = vmatpush1.msra.mxu0 0.0
      %285 = vmatprep.subr.mxu0 0.0
      %286 = vmatpush1.msra.mxu0 0.0
      %287 = vmatprep.subr.mxu0 0.0
      %288 = vmatpush1.msra.mxu0 0.0
      %289 = vmatprep.subr.mxu0 0.0
      %290 = vmatpush1.msra.mxu0 0.0
      %291 = vmatprep.subr.mxu0 0.0
      %292 = vmatpush1.msra.mxu0 0.0
      %293 = vmatprep.subr.mxu0 0.0
      %294 = vmatpush1.msra.mxu0 0.0
      %295 = vmatprep.subr.mxu0 0.0
      %296 = vmatpush1.msra.mxu0 0.0
      %297 = vmatprep.subr.mxu0 0.0
      %298 = vmatpush1.msra.mxu0 0.0
      %299 = vmatprep.subr.mxu0 0.0
      %300 = vmatpush1.msra.mxu0 0.0
      %301 = vmatprep.mubr.f32.mxu0 0.0
      %302 = vmatmul.mubr.f32.gmra.mrb[0].mxu0 %v220
      %v303 = vpop.f32.mrb[0].mxu0
      %v304 = vadd.f32 0.0, %v303
      %v305 = vpop.f32.mrb[0].mxu0
      %306 = vdwg.mxu0
      %v307 = vrot.slane %v304, 4
      %v308 = vadd.f32 %v304, %v307
      %v309 = vrot.slane %v308, 2
      %v310 = vadd.f32 %v308, %v309
      %v311 = vrot.slane %v310, 1
      %v312 = vadd.f32 %v310, %v311
      %v313 = vmul.f32 %v304, %v304
      %v314 = vrot.slane %v313, 4
      %v315 = vadd.f32 %v313, %v314
      %v316 = vrot.slane %v315, 2
      %v317 = vadd.f32 %v315, %v316
      %v318 = vrot.slane %v317, 1
      %v319 = vadd.f32 %v317, %v318
      %v320 = vld [vmem:[%s5] sm:$0x1]
      %v321 = vld [vmem:[%s6] sm:$0x1]
      %v322 = vmul.f32 %v312, 0.125
      %v323 = vmul.f32 %v319, 0.125
      %v324 = vmul.f32 %v322, %v322
      %v325 = vsub.f32 %v323, %v324
      %v326 = vadd.f32 %v325, 1e-05
      %v327 = vrsqrt.pop %v326
      %v328 = vmul.f32 %v320, %v327
      %v329 = vmul.f32 %v322, %v328
      %v330 = vsub.f32 %v321, %v329
      %v332 = vlaneseq
      %v333 = vshrl.u32 %v332, 7
      %v334 = vsub.s32 0, %v333
      %v335 = vrot.slane %v328, %v334
      %v337 = vmul.f32 %v304, %v335
      %v339 = vlaneseq
      %v340 = vshrl.u32 %v339, 7
      %v341 = vsub.s32 0, %v340
      %v342 = vrot.slane %v330, %v341
      %v344 = vadd.f32 %v337, %v342
      %v345 = vtanh.pop %v344
      %v346 = vld [vmem:[#allocation10] sm:$0xff]
      %v347 = vld [vmem:[#allocation10 + $0x8] sm:$0xff]
      %v348 = vld [vmem:[#allocation10 + $0x10] sm:$0xff]
      %v349 = vld [vmem:[#allocation10 + $0x18] sm:$0xff]
      %v350 = vld [vmem:[#allocation10 + $0x20] sm:$0xff]
      %v351 = vld [vmem:[#allocation10 + $0x28] sm:$0xff]
      %v352 = vld [vmem:[#allocation10 + $0x30] sm:$0xff]
      %v353 = vld [vmem:[#allocation10 + $0x38] sm:$0xff]
      %v354 = vld [vmem:[#allocation10 + $0x40] sm:$0xff]
      %v355 = vld [vmem:[#allocation10 + $0x48] sm:$0xff]
      %v356 = vld [vmem:[#allocation10 + $0x50] sm:$0xff]
      %v357 = vld [vmem:[#allocation10 + $0x58] sm:$0xff]
      %v358 = vld [vmem:[#allocation10 + $0x60] sm:$0xff]
      %v359 = vld [vmem:[#allocation10 + $0x68] sm:$0xff]
      %v360 = vld [vmem:[#allocation10 + $0x70] sm:$0xff]
      %v361 = vld [vmem:[#allocation10 + $0x78] sm:$0xff]
      %v362 = vld [vmem:[%s8] sm:$0x1]
      %v364 = vlaneseq
      %v365 = vshrl.u32 %v364, 7
      %v366 = vsub.s32 0, %v365
      %v367 = vrot.slane %v362, %v366
      %369 = vmatprep.subr.mxu0 0.0
      %370 = vmatpush1.msra.mxu0 %v346
      %371 = vmatprep.subr.mxu0 0.0
      %372 = vmatpush1.msra.mxu0 %v347
      %373 = vmatprep.subr.mxu0 0.0
      %374 = vmatpush1.msra.mxu0 %v348
      %375 = vmatprep.subr.mxu0 0.0
      %376 = vmatpush1.msra.mxu0 %v349
      %377 = vmatprep.subr.mxu0 0.0
      %378 = vmatpush1.msra.mxu0 %v350
      %379 = vmatprep.subr.mxu0 0.0
      %380 = vmatpush1.msra.mxu0 %v351
      %381 = vmatprep.subr.mxu0 0.0
      %382 = vmatpush1.msra.mxu0 %v352
      %383 = vmatprep.subr.mxu0 0.0
      %384 = vmatpush1.msra.mxu0 %v353
      %385 = vmatprep.subr.mxu0 0.0
      %386 = vmatpush1.msra.mxu0 %v354
      %387 = vmatprep.subr.mxu0 0.0
      %388 = vmatpush1.msra.mxu0 %v355
      %389 = vmatprep.subr.mxu0 0.0
      %390 = vmatpush1.msra.mxu0 %v356
      %391 = vmatprep.subr.mxu0 0.0
      %392 = vmatpush1.msra.mxu0 %v357
      %393 = vmatprep.subr.mxu0 0.0
      %394 = vmatpush1.msra.mxu0 %v358
      %395 = vmatprep.subr.mxu0 0.0
      %396 = vmatpush1.msra.mxu0 %v359
      %397 = vmatprep.subr.mxu0 0.0
      %398 = vmatpush1.msra.mxu0 %v360
      %399 = vmatprep.subr.mxu0 0.0
      %400 = vmatpush1.msra.mxu0 %v361
      %401 = vmatprep.subr.mxu0 0.0
      %402 = vmatpush1.msra.mxu0 0.0
      %403 = vmatprep.subr.mxu0 0.0
      %404 = vmatpush1.msra.mxu0 0.0
      %405 = vmatprep.subr.mxu0 0.0
      %406 = vmatpush1.msra.mxu0 0.0
      %407 = vmatprep.subr.mxu0 0.0
      %408 = vmatpush1.msra.mxu0 0.0
      %409 = vmatprep.subr.mxu0 0.0
      %410 = vmatpush1.msra.mxu0 0.0
      %411 = vmatprep.subr.mxu0 0.0
      %412 = vmatpush1.msra.mxu0 0.0
      %413 = vmatprep.subr.mxu0 0.0
      %414 = vmatpush1.msra.mxu0 0.0
      %415 = vmatprep.subr.mxu0 0.0
      %416 = vmatpush1.msra.mxu0 0.0
      %417 = vmatprep.subr.mxu0 0.0
      %418 = vmatpush1.msra.mxu0 0.0
      %419 = vmatprep.subr.mxu0 0.0
      %420 = vmatpush1.msra.mxu0 0.0
      %421 = vmatprep.subr.mxu0 0.0
      %422 = vmatpush1.msra.mxu0 0.0
      %423 = vmatprep.subr.mxu0 0.0
      %424 = vmatpush1.msra.mxu0 0.0
      %425 = vmatprep.subr.mxu0 0.0
      %426 = vmatpush1.msra.mxu0 0.0
      %427 = vmatprep.subr.mxu0 0.0
      %428 = vmatpush1.msra.mxu0 0.0
      %429 = vmatprep.subr.mxu0 0.0
      %430 = vmatpush1.msra.mxu0 0.0
      %431 = vmatprep.subr.mxu0 0.0
      %432 = vmatpush1.msra.mxu0 0.0
      %433 = vmatprep.mubr.f32.mxu0 0.0
      %434 = vmatmul.mubr.f32.gmra.mrb[0].mxu0 %v345
      %v435 = vpop.f32.mrb[0].mxu0
      %v436 = vadd.f32 %v367, %v435
      %v437 = vpop.f32.mrb[0].mxu0
      %438 = vdwg.mxu0
      %439 = vst [vmem:[#allocation11] sm:$0xff] %v436
    $region57: #{mlp_forward.1} parent=1 // pred_fallthru
      _
    // Predicated region
    $region58: #{mlp_forward.1} parent=1 // pred_check
      _
    $region59: #{mlp_forward.1} parent=1 // pred_check_branch
      %441 = sbr.rel (0) target = $region61
    $region60: #{mlp_forward.1} parent=1 // pred_region
      %s443 = ssub.s32 128, 128
      %444 = vsyncadd [#allocation7], %s443
      %s446 = sshll.u32 [#allocation11], 4
      %s447 = int_to_ptr.vmem [resolvable:$true] %s446
      %449 = dma.vmem_to_hbm [thread:$0]  %s447, 128, %s9, [#allocation7]
    $region61: #{mlp_forward.1} parent=1 // pred_fallthru
      _
    // Predicated region
    $region62: #{mlp_forward.1} parent=1 // pred_check
      _
    $region63: #{mlp_forward.1} parent=1 // pred_check_branch
      %451 = sbr.rel (0) target = $region65
    $region64: #{mlp_forward.1} parent=1 // pred_region
      %452 = dma.done [#allocation7], 128
    $region65: #{mlp_forward.1} parent=1 // pred_fallthru
      _
    %453 = vsyncpa [#allocation6], 1
    %454 = vsyncpa [#allocation9], 1
    %455 = vsyncpa [#allocation7], 1

</llo_original>
